<compile_context>
chip_gen: v7x
topology: tpu7x:2x2x1
jax: 0.10.0
libtpu: 0.0.40
codegen_flags: <defaults>
</compile_context>

<pallas_src>
import jax
import jax.numpy as jnp
from jax.experimental import pallas as pl
from jax.experimental.pallas import tpu as pltpu


def _round_up(a: int, m: int) -> int:
    return (a + m - 1) // m * m


def mlp_kernel(x_ref, w1_ref, b1_ref, w2_ref, b2_ref, w3_ref, b3_ref, o_ref):
    # Cast x to the compute dtype inside the kernel (no extra HBM copy outside).
    x = x_ref[...].astype(w1_ref.dtype)

    # Layer 1: Linear + (Dropout=identity) + ReLU.  MXU, f32 accumulation.
    h1 = jnp.dot(x, w1_ref[...], preferred_element_type=jnp.float32)
    h1 = jnp.maximum(h1 + b1_ref[...], 0.0)

    # Layer 2: Linear + (Dropout=identity) + ReLU (H2 padded to 128 -> lane-dense).
    h2 = jnp.dot(h1.astype(w2_ref.dtype), w2_ref[...],
                 preferred_element_type=jnp.float32)
    h2 = jnp.maximum(h2 + b2_ref[...], 0.0)

    # Output layer: Linear(h2_dim, 1) as VPU multiply + XLU lane reduction instead
    # of a wasteful (TM,128)x(128,1) MXU pass.  w3 is passed as a (1, H2_P) f32 row.
    o = jnp.sum(h2 * w3_ref[...], axis=-1, keepdims=True) + b3_ref[...]
    o_ref[...] = o.astype(o_ref.dtype)


def neural_network_forward(x, w1, b1, w2, b2, w3, b3, *,
                           tm_max=1024,
                           compute_dtype=jnp.bfloat16,
                           core_parallel=False):
    """Forward pass of NeuralNetwork (eval-mode dropout = identity).

    x : (B, ...) -> flattened to (B, in_dim); streamed to the kernel as-is
        (no host-side pad/cast copy of the dominant HBM stream).
    w1: (in_dim, h1_dim)   b1: (h1_dim,) or (1, h1_dim)
    w2: (h1_dim, h2_dim)   b2: (h2_dim,) or (1, h2_dim)
    w3: (h2_dim, 1)        b3: (1,) / (1, 1)
    Returns logits (B, 1) float32.
    """
    # nn.Flatten()
    x = x.reshape(x.shape[0], -1)
    B, in_dim = x.shape
    h1_dim = w1.shape[1]
    h2_dim = w2.shape[1]
    out_dim = w3.shape[1]
    assert out_dim == 1
    assert w1.shape[0] == in_dim

    f32 = jnp.float32
    H2_P = _round_up(h2_dim, 128)          # 64 -> 128 (lane-dense layer-2/3)
    TM = min(tm_max, _round_up(B, 8))      # sublane-aligned batch tile
    grid = (pl.cdiv(B, TM),)               # edge block (if any) is masked on write

    # Weights/biases are tiny: cast / pad them once on the host.  x is NOT touched.
    w1_c = w1.astype(compute_dtype)                                   # (in_dim, h1)
    b1_c = b1.reshape(1, h1_dim).astype(f32)
    w2_c = jnp.pad(w2.astype(compute_dtype), ((0, 0), (0, H2_P - h2_dim)))
    b2_c = jnp.pad(b2.reshape(1, h2_dim).astype(f32),
                   ((0, 0), (0, H2_P - h2_dim)))
    w3_row = jnp.pad(w3.reshape(h2_dim, 1).T.astype(f32),
                     ((0, 0), (0, H2_P - h2_dim)))                     # (1, H2_P)
    b3_c = b3.reshape(1, 1).astype(f32)

    const = lambda i: (0, 0)   # weights/biases stay VMEM-resident across grid steps
    # NOTE: could add pipeline_mode=pl.Buffered(1) on the constant-index operands
    # to shave ~1-2 MiB of double-buffer VMEM; left at defaults for portability.

    w_itemsize = jnp.dtype(compute_dtype).itemsize
    cost = pl.CostEstimate(
        flops=2 * B * (in_dim * h1_dim + h1_dim * H2_P + H2_P),
        transcendentals=0,
        bytes_accessed=(x.size * x.dtype.itemsize
                        + (w1_c.size + w2_c.size) * w_itemsize
                        + (b1_c.size + b2_c.size + w3_row.size + b3_c.size) * 4
                        + B * 4),
    )

    batch_sem = pltpu.CORE_PARALLEL if core_parallel else "parallel"

    out = pl.pallas_call(
        mlp_kernel,
        out_shape=jax.ShapeDtypeStruct((B, 1), jnp.float32),
        grid_spec=pltpu.PrefetchScalarGridSpec(
            num_scalar_prefetch=0,
            grid=grid,
            in_specs=[
                pl.BlockSpec((TM, in_dim), lambda i: (i, 0)),   # x tile (unpadded)
                pl.BlockSpec((in_dim, h1_dim), const),          # w1 (K matches x)
                pl.BlockSpec((1, h1_dim), const),               # b1
                pl.BlockSpec((h1_dim, H2_P), const),            # w2 (N padded)
                pl.BlockSpec((1, H2_P), const),                 # b2
                pl.BlockSpec((1, H2_P), const),                 # w3 row
                pl.BlockSpec((1, 1), const),                    # b3
            ],
            out_specs=pl.BlockSpec((TM, 1), lambda i: (i, 0)),
        ),
        compiler_params=pltpu.CompilerParams(
            dimension_semantics=(batch_sem,)),
        cost_estimate=cost,
    )(x, w1_c, b1_c, w2_c, b2_c, w3_row, b3_c)

    return out


def init_params(key, in_dim=811, h1_dim=256, h2_dim=64, out_dim=1):
    """Deterministic synthetic init (uniform, kaiming-scale like nn.Linear)."""
    ks = jax.random.split(key, 6)

    def lin(kw, kb, fan_in, fan_out):
        bound = 1.0 / jnp.sqrt(fan_in)
        w = jax.random.uniform(kw, (fan_in, fan_out), jnp.float32, -bound, bound)
        b = jax.random.uniform(kb, (1, fan_out), jnp.float32, -bound, bound)
        return w, b

    w1, b1 = lin(ks[0], ks[1], in_dim, h1_dim)
    w2, b2 = lin(ks[2], ks[3], h1_dim, h2_dim)
    w3, b3 = lin(ks[4], ks[5], h2_dim, out_dim)
    return w1, b1, w2, b2, w3, b3


if __name__ == "__main__":
    key = jax.random.PRNGKey(0)
    k_x, k_p = jax.random.split(key)

    B, IN, H1, H2, OUT = 16, 811, 256, 64, 1
    # Input already flat -> nn.Flatten is a no-op reshape on (B, 811).
    x = jax.random.normal(k_x, (B, IN), jnp.float32)
    w1, b1, w2, b2, w3, b3 = init_params(k_p, IN, H1, H2, OUT)

    # Reference in plain JAX f32 (eval-mode dropout = identity).
    h1 = jnp.maximum(x @ w1 + b1, 0.0)
    h2 = jnp.maximum(h1 @ w2 + b2, 0.0)
    ref = h2 @ w3 + b3

    # 1) Default path: bf16 matmul feeds, f32 accumulation/epilogue.
    logits_bf16 = neural_network_forward(x, w1, b1, w2, b2, w3, b3)
    logits_bf16 = jax.block_until_ready(logits_bf16)

    # 2) Bit-tight f32 path.
    logits_f32 = neural_network_forward(x, w1, b1, w2, b2, w3, b3,
                                        compute_dtype=jnp.float32)
    logits_f32 = jax.block_until_ready(logits_f32)

    # 3) Multi-step batch grid (TM=8 -> grid of 2) to exercise pipelined tiling.
    logits_tiled = neural_network_forward(x, w1, b1, w2, b2, w3, b3,
                                          tm_max=8, compute_dtype=jnp.float32)
    logits_tiled = jax.block_until_ready(logits_tiled)

    # 4) Ragged batch (B=13 < TM=16): edge block reads unspecified rows, outputs
    #    masked on writeback -- the path large unpadded batches rely on.
    logits_ragged = neural_network_forward(x[:13], w1, b1, w2, b2, w3, b3,
                                           compute_dtype=jnp.float32)
    logits_ragged = jax.block_until_ready(logits_ragged)

    assert logits_bf16.shape == (B, OUT)
    assert jnp.allclose(logits_f32, ref, atol=1e-4, rtol=1e-4)
    assert jnp.allclose(logits_tiled, ref, atol=1e-4, rtol=1e-4)
    assert jnp.allclose(logits_ragged, ref[:13], atol=1e-4, rtol=1e-4)
    assert jnp.allclose(logits_bf16, ref, atol=5e-2, rtol=5e-2)

    print("KERNEL_OK")
</pallas_src>

<mosaic_0001>
module attributes {stable_mosaic.version = 11 : i64} {
  func.func @mlp_kernel(%arg0: i32, %arg1: memref<16x811xf32, #tpu.memory_space<vmem>>, %arg2: memref<811x256xbf16, #tpu.memory_space<vmem>>, %arg3: memref<1x256xf32, #tpu.memory_space<vmem>>, %arg4: memref<256x128xbf16, #tpu.memory_space<vmem>>, %arg5: memref<1x128xf32, #tpu.memory_space<vmem>>, %arg6: memref<1x128xf32, #tpu.memory_space<vmem>>, %arg7: memref<1x1xf32, #tpu.memory_space<vmem>>, %arg8: memref<16x1xf32, #tpu.memory_space<vmem>>) attributes {dimension_semantics = [#tpu.dimension_semantics<parallel>], iteration_bounds = array<i64: 1>, scalar_prefetch = 0 : i64, scratch_operands = 0 : i64, tpu.core_type = #tpu.core_type<tc>, window_params = [{transform_indices = @transform_0, window_bounds = array<i64: 16, 811>}, {pipeline_mode = #tpu.pipeline_mode<synchronous>, transform_indices = @transform_1, window_bounds = array<i64: 811, 256>}, {pipeline_mode = #tpu.pipeline_mode<synchronous>, transform_indices = @transform_2, window_bounds = array<i64: 1, 256>}, {pipeline_mode = #tpu.pipeline_mode<synchronous>, transform_indices = @transform_3, window_bounds = array<i64: 256, 128>}, {pipeline_mode = #tpu.pipeline_mode<synchronous>, transform_indices = @transform_4, window_bounds = array<i64: 1, 128>}, {pipeline_mode = #tpu.pipeline_mode<synchronous>, transform_indices = @transform_5, window_bounds = array<i64: 1, 128>}, {pipeline_mode = #tpu.pipeline_mode<synchronous>, transform_indices = @transform_6, window_bounds = array<i64: 1, 1>}, {transform_indices = @transform_7, window_bounds = array<i64: 16, 1>}]} {
    %c0 = arith.constant 0 : index
    %c0_0 = arith.constant 0 : index
    %0 = vector.load %arg1[%c0, %c0_0] : memref<16x811xf32, #tpu.memory_space<vmem>>, vector<16x811xf32>
    %1 = arith.truncf %0 : vector<16x811xf32> to vector<16x811xbf16>
    %c0_1 = arith.constant 0 : index
    %c0_2 = arith.constant 0 : index
    %2 = vector.load %arg2[%c0_1, %c0_2] : memref<811x256xbf16, #tpu.memory_space<vmem>>, vector<811x256xbf16>
    %cst = arith.constant dense<0.000000e+00> : vector<16x256xf32>
    %3 = tpu.matmul %1, %2, %cst {dimension_numbers = #tpu.dot_dimension_numbers<[1], [0], [0], [1], [0, 0, 1, 1], [], []>} : vector<16x811xbf16>, vector<811x256xbf16>, vector<16x256xf32> -> vector<16x256xf32>
    %c0_3 = arith.constant 0 : index
    %c0_4 = arith.constant 0 : index
    %4 = vector.load %arg3[%c0_3, %c0_4] : memref<1x256xf32, #tpu.memory_space<vmem>>, vector<1x256xf32>
    %5 = vector.broadcast %4 : vector<1x256xf32> to vector<16x256xf32>
    %6 = arith.addf %3, %5 : vector<16x256xf32>
    %cst_5 = arith.constant 0.000000e+00 : f32
    %7 = vector.broadcast %cst_5 : f32 to vector<16x256xf32>
    %8 = arith.maximumf %6, %7 : vector<16x256xf32>
    %9 = arith.truncf %8 : vector<16x256xf32> to vector<16x256xbf16>
    %c0_6 = arith.constant 0 : index
    %c0_7 = arith.constant 0 : index
    %10 = vector.load %arg4[%c0_6, %c0_7] : memref<256x128xbf16, #tpu.memory_space<vmem>>, vector<256x128xbf16>
    %cst_8 = arith.constant dense<0.000000e+00> : vector<16x128xf32>
    %11 = tpu.matmul %9, %10, %cst_8 {dimension_numbers = #tpu.dot_dimension_numbers<[1], [0], [0], [1], [0, 0, 1, 1], [], []>} : vector<16x256xbf16>, vector<256x128xbf16>, vector<16x128xf32> -> vector<16x128xf32>
    %c0_9 = arith.constant 0 : index
    %c0_10 = arith.constant 0 : index
    %12 = vector.load %arg5[%c0_9, %c0_10] : memref<1x128xf32, #tpu.memory_space<vmem>>, vector<1x128xf32>
    %13 = vector.broadcast %12 : vector<1x128xf32> to vector<16x128xf32>
    %14 = arith.addf %11, %13 : vector<16x128xf32>
    %cst_11 = arith.constant 0.000000e+00 : f32
    %15 = vector.broadcast %cst_11 : f32 to vector<16x128xf32>
    %16 = arith.maximumf %14, %15 : vector<16x128xf32>
    %c0_12 = arith.constant 0 : index
    %c0_13 = arith.constant 0 : index
    %17 = vector.load %arg6[%c0_12, %c0_13] : memref<1x128xf32, #tpu.memory_space<vmem>>, vector<1x128xf32>
    %18 = vector.broadcast %17 : vector<1x128xf32> to vector<16x128xf32>
    %19 = arith.mulf %16, %18 : vector<16x128xf32>
    %cst_14 = arith.constant dense<0.000000e+00> : vector<16xf32>
    %20 = vector.multi_reduction <add>, %19, %cst_14 [1] : vector<16x128xf32> to vector<16xf32>
    %21 = vector.shape_cast %20 : vector<16xf32> to vector<16x1xf32>
    %c0_15 = arith.constant 0 : index
    %c0_16 = arith.constant 0 : index
    %22 = vector.load %arg7[%c0_15, %c0_16] : memref<1x1xf32, #tpu.memory_space<vmem>>, vector<1x1xf32>
    %23 = vector.broadcast %22 : vector<1x1xf32> to vector<16x1xf32>
    %24 = arith.addf %21, %23 : vector<16x1xf32>
    %c0_17 = arith.constant 0 : index
    %c0_18 = arith.constant 0 : index
    %25 = vector.load %arg8[%c0_17, %c0_18] : memref<16x1xf32, #tpu.memory_space<vmem>>, vector<16x1xf32>
    tpu.vector_store %arg8[%c0_17, %c0_18], %24 {strides = array<i32>} : memref<16x1xf32, #tpu.memory_space<vmem>>, vector<16x1xf32>,
    return
  }
  func.func @transform_0(%arg0: i32) -> (i32, i32) {
    %c0_i32 = arith.constant 0 : i32
    %c0_i32_0 = arith.constant 0 : i32
    return %arg0, %c0_i32 : i32, i32
  }
  func.func @transform_1(%arg0: i32) -> (i32, i32) {
    %c0_i32 = arith.constant 0 : i32
    %c0_i32_0 = arith.constant 0 : i32
    %c0_i32_1 = arith.constant 0 : i32
    return %c0_i32, %c0_i32_0 : i32, i32
  }
  func.func @transform_2(%arg0: i32) -> (i32, i32) {
    %c0_i32 = arith.constant 0 : i32
    %c0_i32_0 = arith.constant 0 : i32
    %c0_i32_1 = arith.constant 0 : i32
    return %c0_i32, %c0_i32_0 : i32, i32
  }
  func.func @transform_3(%arg0: i32) -> (i32, i32) {
    %c0_i32 = arith.constant 0 : i32
    %c0_i32_0 = arith.constant 0 : i32
    %c0_i32_1 = arith.constant 0 : i32
    return %c0_i32, %c0_i32_0 : i32, i32
  }
  func.func @transform_4(%arg0: i32) -> (i32, i32) {
    %c0_i32 = arith.constant 0 : i32
    %c0_i32_0 = arith.constant 0 : i32
    %c0_i32_1 = arith.constant 0 : i32
    return %c0_i32, %c0_i32_0 : i32, i32
  }
  func.func @transform_5(%arg0: i32) -> (i32, i32) {
    %c0_i32 = arith.constant 0 : i32
    %c0_i32_0 = arith.constant 0 : i32
    %c0_i32_1 = arith.constant 0 : i32
    return %c0_i32, %c0_i32_0 : i32, i32
  }
  func.func @transform_6(%arg0: i32) -> (i32, i32) {
    %c0_i32 = arith.constant 0 : i32
    %c0_i32_0 = arith.constant 0 : i32
    %c0_i32_1 = arith.constant 0 : i32
    return %c0_i32, %c0_i32_0 : i32, i32
  }
  func.func @transform_7(%arg0: i32) -> (i32, i32) {
    %c0_i32 = arith.constant 0 : i32
    %c0_i32_0 = arith.constant 0 : i32
    return %arg0, %c0_i32 : i32, i32
  }
}

</mosaic_0001>

<llo_original>
// kernel: tpu_custom_call.1
$region0: #{tpu_custom_call.1}
  #allocation0 [shape = 'u32[]', space=smem, size = 0x4, offset = 0x4, fixed_abs, tag = 'smem constant byte address 0x4 - core index']
  #allocation1 [shape = 'u32[144,128]{1,0:T(1,128)}', space=vmem, size = 0x12000, scoped, tag = 'internal scratch']
  #allocation2 [shape = 'f32[1,1]{1,0:T(1,128)S(1)}', space=vmem, size = 0x200, scoped, tag = 'scoped memory for tpu_custom_call.1']
  %s0 = inlined_call_operand.hbm [shape: f32[16,811], index: 0, kind: input, shape index: {}]
  %s1 = inlined_call_operand.hbm [shape: bf16[811,256], index: 1, kind: input, shape index: {}]
  %s2 = inlined_call_operand.vmem [shape: f32[1,256], index: 2, kind: input, shape index: {}]
  %s3 = inlined_call_operand.hbm [shape: bf16[256,128], index: 3, kind: input, shape index: {}]
  %s4 = inlined_call_operand.vmem [shape: f32[1,128], index: 4, kind: input, shape index: {}]
  %s5 = inlined_call_operand.vmem [shape: f32[1,128], index: 5, kind: input, shape index: {}]
  %s6 = inlined_call_operand.<no memory space> [shape: f32[1,1], index: 6, kind: input, shape index: {}]
  %s7 = inlined_call_operand.vmem [shape: f32[16,1], index: 7, kind: output, shape index: {}]
  %s8 = sld [smem:[#allocation0]]
  $region50: #{tpu_custom_call.1} parent=0
    _
  %s10 = ssub.s32 1, %s8
  %s11 = scalar_select 0, %s10, %s8
  %v12 = vstv %s6
  %13 = vst [vmem:[#allocation2] sm:$0x1] %v12
  $region1: #{tpu_custom_call.1} parent=0
    #allocation3 [shape = 'u8[57344]{0}', space=vmem, size = 0xe000, scoped, tag = 'input window, operand 0, single buffered']
    #allocation4 [shape = 's32[1]{0}', space=sflag, size = 0x4, scoped, tag = 'scoped memory for tpu_custom_call.1']
    #allocation5 [shape = 'u8[417792]{0}', space=vmem, size = 0x66000, scoped, tag = 'input window, operand 1, single buffered']
    #allocation6 [shape = 's32[1]{0}', space=sflag, size = 0x4, scoped, tag = 'scoped memory for tpu_custom_call.1']
    #allocation7 [shape = 'u8[65536]{0}', space=vmem, size = 0x10000, scoped, tag = 'input window, operand 3, single buffered']
    %14 = vsyncpa [#allocation4], 0
    %15 = vsyncpa [#allocation6], 0
    // Predicated region
    $region2: #{tpu_custom_call.1} parent=1 // pred_check
      _
    $region3: #{tpu_custom_call.1} parent=1 // pred_check_branch
      %17 = sbr.rel (0) target = $region5
    $region4: #{tpu_custom_call.1} parent=1 // pred_region
      %s19 = ssub.s32 1792, 1792
      %20 = vsyncadd [#allocation4], %s19
      %s21 = sshll.u32 [#allocation3], 4
      %s22 = int_to_ptr.vmem [resolvable:$true] %s21
      %27 = dma.hbm_to_vmem [thread:$0]  %s0, 1792, %s22, [#allocation4], 896, 896, 56
    $region5: #{tpu_custom_call.1} parent=1 // pred_fallthru
      _
    // Predicated region
    $region6: #{tpu_custom_call.1} parent=1 // pred_check
      _
    $region7: #{tpu_custom_call.1} parent=1 // pred_check_branch
      %29 = sbr.rel (0) target = $region9
    $region8: #{tpu_custom_call.1} parent=1 // pred_region
      %s31 = ssub.s32 13056, 13056
      %32 = vsyncadd [#allocation6], %s31
      %s33 = sshll.u32 [#allocation5], 4
      %s34 = int_to_ptr.vmem [resolvable:$true] %s33
      %39 = dma.hbm_to_vmem [thread:$0]  %s1, 13056, %s34, [#allocation6], 128, 128, 8
    $region9: #{tpu_custom_call.1} parent=1 // pred_fallthru
      _
    // Predicated region
    $region10: #{tpu_custom_call.1} parent=1 // pred_check
      _
    $region11: #{tpu_custom_call.1} parent=1 // pred_check_branch
      %41 = sbr.rel (0) target = $region13
    $region12: #{tpu_custom_call.1} parent=1 // pred_region
      _
    $region13: #{tpu_custom_call.1} parent=1 // pred_fallthru
      _
    // Predicated region
    $region14: #{tpu_custom_call.1} parent=1 // pred_check
      _
    $region15: #{tpu_custom_call.1} parent=1 // pred_check_branch
      %43 = sbr.rel (0) target = $region17
    $region16: #{tpu_custom_call.1} parent=1 // pred_region
      %s45 = ssub.s32 2048, 2048
      %46 = vsyncadd [#allocation6], %s45
      %s47 = sshll.u32 [#allocation7], 4
      %s48 = int_to_ptr.vmem [resolvable:$true] %s47
      %53 = dma.hbm_to_vmem [thread:$0]  %s3, 2048, %s48, [#allocation6], 64, 64, 4
    $region17: #{tpu_custom_call.1} parent=1 // pred_fallthru
      _
    // Predicated region
    $region18: #{tpu_custom_call.1} parent=1 // pred_check
      _
    $region19: #{tpu_custom_call.1} parent=1 // pred_check_branch
      %55 = sbr.rel (0) target = $region21
    $region20: #{tpu_custom_call.1} parent=1 // pred_region
      _
    $region21: #{tpu_custom_call.1} parent=1 // pred_fallthru
      _
    // Predicated region
    $region22: #{tpu_custom_call.1} parent=1 // pred_check
      _
    $region23: #{tpu_custom_call.1} parent=1 // pred_check_branch
      %57 = sbr.rel (0) target = $region25
    $region24: #{tpu_custom_call.1} parent=1 // pred_region
      _
    $region25: #{tpu_custom_call.1} parent=1 // pred_fallthru
      _
    // Predicated region
    $region26: #{tpu_custom_call.1} parent=1 // pred_check
      _
    $region27: #{tpu_custom_call.1} parent=1 // pred_check_branch
      %59 = sbr.rel (0) target = $region29
    $region28: #{tpu_custom_call.1} parent=1 // pred_region
      _
    $region29: #{tpu_custom_call.1} parent=1 // pred_fallthru
      _
    // Predicated region
    $region30: #{tpu_custom_call.1} parent=1 // pred_check
      _
    $region31: #{tpu_custom_call.1} parent=1 // pred_check_branch
      %61 = sbr.rel (0) target = $region33
    $region32: #{tpu_custom_call.1} parent=1 // pred_region
      %62 = dma.done [#allocation4], 1792
    $region33: #{tpu_custom_call.1} parent=1 // pred_fallthru
      _
    // Predicated region
    $region34: #{tpu_custom_call.1} parent=1 // pred_check
      _
    $region35: #{tpu_custom_call.1} parent=1 // pred_check_branch
      %64 = sbr.rel (0) target = $region37
    $region36: #{tpu_custom_call.1} parent=1 // pred_region
      %65 = dma.done [#allocation6], 13056
    $region37: #{tpu_custom_call.1} parent=1 // pred_fallthru
      _
    // Predicated region
    $region38: #{tpu_custom_call.1} parent=1 // pred_check
      _
    $region39: #{tpu_custom_call.1} parent=1 // pred_check_branch
      %67 = sbr.rel (0) target = $region41
    $region40: #{tpu_custom_call.1} parent=1 // pred_region
      %68 = dma.done [#allocation6], 2048
    $region41: #{tpu_custom_call.1} parent=1 // pred_fallthru
      _
    %v70 = vld [vmem:[#allocation3] sm:$0xff]
    %v71 = vld [vmem:[#allocation3 + $0x8] sm:$0xff]
    %v72 = vld [vmem:[#allocation3 + $0x10] sm:$0xff]
    %v73 = vld [vmem:[#allocation3 + $0x18] sm:$0xff]
    %v74 = vld [vmem:[#allocation3 + $0x20] sm:$0xff]
    %v75 = vld [vmem:[#allocation3 + $0x28] sm:$0xff]
    %v76 = vld [vmem:[#allocation3 + $0x30] sm:$0xff]
    %v77 = vld [vmem:[#allocation3 + $0x38] sm:$0xff]
    %v78 = vld [vmem:[#allocation3 + $0x40] sm:$0xff]
    %v79 = vld [vmem:[#allocation3 + $0x48] sm:$0xff]
    %v80 = vld [vmem:[#allocation3 + $0x50] sm:$0xff]
    %v81 = vld [vmem:[#allocation3 + $0x58] sm:$0xff]
    %v82 = vld [vmem:[#allocation3 + $0x60] sm:$0xff]
    %v83 = vld [vmem:[#allocation3 + $0x68] sm:$0xff]
    %v84 = vpack.c.bf16 %v77, %v70
    %v85 = vpack.c.bf16 %v78, %v71
    %v86 = vpack.c.bf16 %v79, %v72
    %v87 = vpack.c.bf16 %v80, %v73
    %v88 = vpack.c.bf16 %v81, %v74
    %v89 = vpack.c.bf16 %v82, %v75
    %v90 = vpack.c.bf16 %v83, %v76
    %v91 = vld [vmem:[#allocation5] sm:$0xff]
    %v92 = vld [vmem:[#allocation5 + $0x8] sm:$0xff]
    %v93 = vld [vmem:[#allocation5 + $0x10] sm:$0xff]
    %v94 = vld [vmem:[#allocation5 + $0x18] sm:$0xff]
    %v95 = vld [vmem:[#allocation5 + $0x20] sm:$0xff]
    %v96 = vld [vmem:[#allocation5 + $0x28] sm:$0xff]
    %v97 = vld [vmem:[#allocation5 + $0x30] sm:$0xff]
    %v98 = vld [vmem:[#allocation5 + $0x38] sm:$0xff]
    %v99 = vld [vmem:[#allocation5 + $0x40] sm:$0xff]
    %v100 = vld [vmem:[#allocation5 + $0x48] sm:$0xff]
    %v101 = vld [vmem:[#allocation5 + $0x50] sm:$0xff]
    %v102 = vld [vmem:[#allocation5 + $0x58] sm:$0xff]
    %v103 = vld [vmem:[#allocation5 + $0x60] sm:$0xff]
    %v104 = vld [vmem:[#allocation5 + $0x68] sm:$0xff]
    %v105 = vld [vmem:[#allocation5 + $0x70] sm:$0xff]
    %v106 = vld [vmem:[#allocation5 + $0x78] sm:$0xff]
    %v107 = vld [vmem:[#allocation5 + $0x80] sm:$0xff]
    %v108 = vld [vmem:[#allocation5 + $0x88] sm:$0xff]
    %v109 = vld [vmem:[#allocation5 + $0x90] sm:$0xff]
    %v110 = vld [vmem:[#allocation5 + $0x98] sm:$0xff]
    %v111 = vld [vmem:[#allocation5 + $0xa0] sm:$0xff]
    %v112 = vld [vmem:[#allocation5 + $0xa8] sm:$0xff]
    %v113 = vld [vmem:[#allocation5 + $0xb0] sm:$0xff]
    %v114 = vld [vmem:[#allocation5 + $0xb8] sm:$0xff]
    %v115 = vld [vmem:[#allocation5 + $0xc0] sm:$0xff]
    %v116 = vld [vmem:[#allocation5 + $0xc8] sm:$0xff]
    %v117 = vld [vmem:[#allocation5 + $0xd0] sm:$0xff]
    %v118 = vld [vmem:[#allocation5 + $0xd8] sm:$0xff]
    %v119 = vld [vmem:[#allocation5 + $0xe0] sm:$0xff]
    %v120 = vld [vmem:[#allocation5 + $0xe8] sm:$0xff]
    %v121 = vld [vmem:[#allocation5 + $0xf0] sm:$0xff]
    %v122 = vld [vmem:[#allocation5 + $0xf8] sm:$0xff]
    %v123 = vld [vmem:[#allocation5 + $0x100] sm:$0xff]
    %v124 = vld [vmem:[#allocation5 + $0x108] sm:$0xff]
    %v125 = vld [vmem:[#allocation5 + $0x110] sm:$0xff]
    %v126 = vld [vmem:[#allocation5 + $0x118] sm:$0xff]
    %v127 = vld [vmem:[#allocation5 + $0x120] sm:$0xff]
    %v128 = vld [vmem:[#allocation5 + $0x128] sm:$0xff]
    %v129 = vld [vmem:[#allocation5 + $0x130] sm:$0xff]
    %v130 = vld [vmem:[#allocation5 + $0x138] sm:$0xff]
    %v131 = vld [vmem:[#allocation5 + $0x140] sm:$0xff]
    %v132 = vld [vmem:[#allocation5 + $0x148] sm:$0xff]
    %v133 = vld [vmem:[#allocation5 + $0x150] sm:$0xff]
    %v134 = vld [vmem:[#allocation5 + $0x158] sm:$0xff]
    %v135 = vld [vmem:[#allocation5 + $0x160] sm:$0xff]
    %v136 = vld [vmem:[#allocation5 + $0x168] sm:$0xff]
    %v137 = vld [vmem:[#allocation5 + $0x170] sm:$0xff]
    %v138 = vld [vmem:[#allocation5 + $0x178] sm:$0xff]
    %v139 = vld [vmem:[#allocation5 + $0x180] sm:$0xff]
    %v140 = vld [vmem:[#allocation5 + $0x188] sm:$0xff]
    %v141 = vld [vmem:[#allocation5 + $0x190] sm:$0xff]
    %v142 = vld [vmem:[#allocation5 + $0x198] sm:$0xff]
    %v143 = vld [vmem:[#allocation5 + $0x1a0] sm:$0xff]
    %v144 = vld [vmem:[#allocation5 + $0x1a8] sm:$0xff]
    %v145 = vld [vmem:[#allocation5 + $0x1b0] sm:$0xff]
    %v146 = vld [vmem:[#allocation5 + $0x1b8] sm:$0xff]
    %v147 = vld [vmem:[#allocation5 + $0x1c0] sm:$0xff]
    %v148 = vld [vmem:[#allocation5 + $0x1c8] sm:$0xff]
    %v149 = vld [vmem:[#allocation5 + $0x1d0] sm:$0xff]
    %v150 = vld [vmem:[#allocation5 + $0x1d8] sm:$0xff]
    %v151 = vld [vmem:[#allocation5 + $0x1e0] sm:$0xff]
    %v152 = vld [vmem:[#allocation5 + $0x1e8] sm:$0xff]
    %v153 = vld [vmem:[#allocation5 + $0x1f0] sm:$0xff]
    %v154 = vld [vmem:[#allocation5 + $0x1f8] sm:$0xff]
    %v155 = vld [vmem:[#allocation5 + $0x200] sm:$0xff]
    %v156 = vld [vmem:[#allocation5 + $0x208] sm:$0xff]
    %v157 = vld [vmem:[#allocation5 + $0x210] sm:$0xff]
    %v158 = vld [vmem:[#allocation5 + $0x218] sm:$0xff]
    %v159 = vld [vmem:[#allocation5 + $0x220] sm:$0xff]
    %v160 = vld [vmem:[#allocation5 + $0x228] sm:$0xff]
    %v161 = vld [vmem:[#allocation5 + $0x230] sm:$0xff]
    %v162 = vld [vmem:[#allocation5 + $0x238] sm:$0xff]
    %v163 = vld [vmem:[#allocation5 + $0x240] sm:$0xff]
    %v164 = vld [vmem:[#allocation5 + $0x248] sm:$0xff]
    %v165 = vld [vmem:[#allocation5 + $0x250] sm:$0xff]
    %v166 = vld [vmem:[#allocation5 + $0x258] sm:$0xff]
    %v167 = vld [vmem:[#allocation5 + $0x260] sm:$0xff]
    %v168 = vld [vmem:[#allocation5 + $0x268] sm:$0xff]
    %v169 = vld [vmem:[#allocation5 + $0x270] sm:$0xff]
    %v170 = vld [vmem:[#allocation5 + $0x278] sm:$0xff]
    %v171 = vld [vmem:[#allocation5 + $0x280] sm:$0xff]
    %v172 = vld [vmem:[#allocation5 + $0x288] sm:$0xff]
    %v173 = vld [vmem:[#allocation5 + $0x290] sm:$0xff]
    %v174 = vld [vmem:[#allocation5 + $0x298] sm:$0xff]
    %v175 = vld [vmem:[#allocation5 + $0x2a0] sm:$0xff]
    %v176 = vld [vmem:[#allocation5 + $0x2a8] sm:$0xff]
    %v177 = vld [vmem:[#allocation5 + $0x2b0] sm:$0xff]
    %v178 = vld [vmem:[#allocation5 + $0x2b8] sm:$0xff]
    %v179 = vld [vmem:[#allocation5 + $0x2c0] sm:$0xff]
    %v180 = vld [vmem:[#allocation5 + $0x2c8] sm:$0xff]
    %v181 = vld [vmem:[#allocation5 + $0x2d0] sm:$0xff]
    %v182 = vld [vmem:[#allocation5 + $0x2d8] sm:$0xff]
    %v183 = vld [vmem:[#allocation5 + $0x2e0] sm:$0xff]
    %v184 = vld [vmem:[#allocation5 + $0x2e8] sm:$0xff]
    %v185 = vld [vmem:[#allocation5 + $0x2f0] sm:$0xff]
    %v186 = vld [vmem:[#allocation5 + $0x2f8] sm:$0xff]
    %v187 = vld [vmem:[#allocation5 + $0x300] sm:$0xff]
    %v188 = vld [vmem:[#allocation5 + $0x308] sm:$0xff]
    %v189 = vld [vmem:[#allocation5 + $0x310] sm:$0xff]
    %v190 = vld [vmem:[#allocation5 + $0x318] sm:$0xff]
    %v191 = vld [vmem:[#allocation5 + $0x320] sm:$0xff]
    %v192 = vld [vmem:[#allocation5 + $0x328] sm:$0x33]
    %v193 = vld [vmem:[%s2] sm:$0x3]
    %v195 = vlaneseq
    %v196 = vshrl.u32 %v195, 7
    %v197 = vsub.s32 0, %v196
    %v198 = vrot.slane %v193, %v197
    %v199 = vlaneseq
    %v200 = vshrl.u32 %v199, 7
    %v201 = vsub.s32 1, %v200
    %v202 = vrot.slane %v193, %v201
    %v307 = vunpack.c.l.b16 %v91
    %v308 = vunpack.c.h.b16 %v91
    %v309 = vunpack.c.l.b16 %v92
    %v310 = vunpack.c.h.b16 %v92
    %v311 = vunpack.c.l.b16 %v93
    %v312 = vunpack.c.h.b16 %v93
    %v313 = vunpack.c.l.b16 %v94
    %v314 = vunpack.c.h.b16 %v94
    %v315 = vunpack.c.l.b16 %v95
    %v316 = vunpack.c.h.b16 %v95
    %v317 = vunpack.c.l.b16 %v96
    %v318 = vunpack.c.h.b16 %v96
    %v319 = vunpack.c.l.b16 %v97
    %v320 = vunpack.c.h.b16 %v97
    %v321 = vunpack.c.l.b16 %v98
    %v322 = vunpack.c.h.b16 %v98
    %v323 = vunpack.c.l.b16 %v99
    %v324 = vunpack.c.h.b16 %v99
    %v325 = vunpack.c.l.b16 %v100
    %v326 = vunpack.c.h.b16 %v100
    %v327 = vunpack.c.l.b16 %v101
    %v328 = vunpack.c.h.b16 %v101
    %v329 = vunpack.c.l.b16 %v102
    %v330 = vunpack.c.h.b16 %v102
    %v331 = vunpack.c.l.b16 %v103
    %v332 = vunpack.c.h.b16 %v103
    %v333 = vunpack.c.l.b16 %v104
    %v334 = vunpack.c.h.b16 %v104
    %v335 = vunpack.c.l.b16 %v105
    %v336 = vunpack.c.h.b16 %v105
    %v337 = vunpack.c.l.b16 %v106
    %v338 = vunpack.c.h.b16 %v106
    %v339 = vunpack.c.l.b16 %v107
    %v340 = vunpack.c.h.b16 %v107
    %v341 = vunpack.c.l.b16 %v108
    %v342 = vunpack.c.h.b16 %v108
    %v343 = vunpack.c.l.b16 %v109
    %v344 = vunpack.c.h.b16 %v109
    %v345 = vunpack.c.l.b16 %v110
    %v346 = vunpack.c.h.b16 %v110
    %v347 = vunpack.c.l.b16 %v111
    %v348 = vunpack.c.h.b16 %v111
    %v349 = vunpack.c.l.b16 %v112
    %v350 = vunpack.c.h.b16 %v112
    %v351 = vunpack.c.l.b16 %v113
    %v352 = vunpack.c.h.b16 %v113
    %v353 = vunpack.c.l.b16 %v114
    %v354 = vunpack.c.h.b16 %v114
    %v355 = vunpack.c.l.b16 %v115
    %v356 = vunpack.c.h.b16 %v115
    %v357 = vunpack.c.l.b16 %v116
    %v358 = vunpack.c.h.b16 %v116
    %v359 = vunpack.c.l.b16 %v117
    %v360 = vunpack.c.h.b16 %v117
    %v361 = vunpack.c.l.b16 %v118
    %v362 = vunpack.c.h.b16 %v118
    %v363 = vunpack.c.l.b16 %v119
    %v364 = vunpack.c.h.b16 %v119
    %v365 = vunpack.c.l.b16 %v120
    %v366 = vunpack.c.h.b16 %v120
    %v367 = vunpack.c.l.b16 %v121
    %v368 = vunpack.c.h.b16 %v121
    %v369 = vunpack.c.l.b16 %v122
    %v370 = vunpack.c.h.b16 %v122
    %v371 = vunpack.c.l.b16 %v123
    %v372 = vunpack.c.h.b16 %v123
    %v373 = vunpack.c.l.b16 %v124
    %v374 = vunpack.c.h.b16 %v124
    %v375 = vunpack.c.l.b16 %v125
    %v376 = vunpack.c.h.b16 %v125
    %v377 = vunpack.c.l.b16 %v126
    %v378 = vunpack.c.h.b16 %v126
    %v379 = vunpack.c.l.b16 %v127
    %v380 = vunpack.c.h.b16 %v127
    %v381 = vunpack.c.l.b16 %v128
    %v382 = vunpack.c.h.b16 %v128
    %v383 = vunpack.c.l.b16 %v129
    %v384 = vunpack.c.h.b16 %v129
    %v385 = vunpack.c.l.b16 %v130
    %v386 = vunpack.c.h.b16 %v130
    %v387 = vunpack.c.l.b16 %v131
    %v388 = vunpack.c.h.b16 %v131
    %v389 = vunpack.c.l.b16 %v132
    %v390 = vunpack.c.h.b16 %v132
    %v391 = vunpack.c.l.b16 %v133
    %v392 = vunpack.c.h.b16 %v133
    %v393 = vunpack.c.l.b16 %v134
    %v394 = vunpack.c.h.b16 %v134
    %v395 = vunpack.c.l.b16 %v135
    %v396 = vunpack.c.h.b16 %v135
    %v397 = vunpack.c.l.b16 %v136
    %v398 = vunpack.c.h.b16 %v136
    %v399 = vunpack.c.l.b16 %v137
    %v400 = vunpack.c.h.b16 %v137
    %v401 = vunpack.c.l.b16 %v138
    %v402 = vunpack.c.h.b16 %v138
    %v403 = vunpack.c.l.b16 %v139
    %v404 = vunpack.c.h.b16 %v139
    %v405 = vunpack.c.l.b16 %v140
    %v406 = vunpack.c.h.b16 %v140
    %v407 = vunpack.c.l.b16 %v141
    %v408 = vunpack.c.h.b16 %v141
    %v409 = vunpack.c.l.b16 %v142
    %v410 = vunpack.c.h.b16 %v142
    %v411 = vunpack.c.l.b16 %v143
    %v412 = vunpack.c.h.b16 %v143
    %v413 = vunpack.c.l.b16 %v144
    %v414 = vunpack.c.h.b16 %v144
    %v415 = vunpack.c.l.b16 %v145
    %v416 = vunpack.c.h.b16 %v145
    %v417 = vunpack.c.l.b16 %v146
    %v418 = vunpack.c.h.b16 %v146
    %v419 = vunpack.c.l.b16 %v147
    %v420 = vunpack.c.h.b16 %v147
    %v421 = vunpack.c.l.b16 %v148
    %v422 = vunpack.c.h.b16 %v148
    %v423 = vunpack.c.l.b16 %v149
    %v424 = vunpack.c.h.b16 %v149
    %v425 = vunpack.c.l.b16 %v150
    %v426 = vunpack.c.h.b16 %v150
    %v427 = vunpack.c.l.b16 %v151
    %v428 = vunpack.c.h.b16 %v151
    %v429 = vunpack.c.l.b16 %v152
    %v430 = vunpack.c.h.b16 %v152
    %v431 = vunpack.c.l.b16 %v153
    %v432 = vunpack.c.h.b16 %v153
    %v433 = vunpack.c.l.b16 %v154
    %v434 = vunpack.c.h.b16 %v154
    %v435 = vunpack.c.l.b16 %v155
    %v436 = vunpack.c.h.b16 %v155
    %v437 = vunpack.c.l.b16 %v156
    %v438 = vunpack.c.h.b16 %v156
    %v439 = vunpack.c.l.b16 %v157
    %v440 = vunpack.c.h.b16 %v157
    %v441 = vunpack.c.l.b16 %v158
    %v442 = vunpack.c.h.b16 %v158
    %v443 = vunpack.c.l.b16 %v159
    %v444 = vunpack.c.h.b16 %v159
    %v445 = vunpack.c.l.b16 %v160
    %v446 = vunpack.c.h.b16 %v160
    %v447 = vunpack.c.l.b16 %v161
    %v448 = vunpack.c.h.b16 %v161
    %v449 = vunpack.c.l.b16 %v162
    %v450 = vunpack.c.h.b16 %v162
    %v451 = vunpack.c.l.b16 %v163
    %v452 = vunpack.c.h.b16 %v163
    %v453 = vunpack.c.l.b16 %v164
    %v454 = vunpack.c.h.b16 %v164
    %v455 = vunpack.c.l.b16 %v165
    %v456 = vunpack.c.h.b16 %v165
    %v457 = vunpack.c.l.b16 %v166
    %v458 = vunpack.c.h.b16 %v166
    %v459 = vunpack.c.l.b16 %v167
    %v460 = vunpack.c.h.b16 %v167
    %v461 = vunpack.c.l.b16 %v168
    %v462 = vunpack.c.h.b16 %v168
    %v463 = vunpack.c.l.b16 %v169
    %v464 = vunpack.c.h.b16 %v169
    %v465 = vunpack.c.l.b16 %v170
    %v466 = vunpack.c.h.b16 %v170
    %v467 = vunpack.c.l.b16 %v171
    %v468 = vunpack.c.h.b16 %v171
    %v469 = vunpack.c.l.b16 %v172
    %v470 = vunpack.c.h.b16 %v172
    %v471 = vunpack.c.l.b16 %v173
    %v472 = vunpack.c.h.b16 %v173
    %v473 = vunpack.c.l.b16 %v174
    %v474 = vunpack.c.h.b16 %v174
    %v475 = vunpack.c.l.b16 %v175
    %v476 = vunpack.c.h.b16 %v175
    %v477 = vunpack.c.l.b16 %v176
    %v478 = vunpack.c.h.b16 %v176
    %v479 = vunpack.c.l.b16 %v177
    %v480 = vunpack.c.h.b16 %v177
    %v481 = vunpack.c.l.b16 %v178
    %v482 = vunpack.c.h.b16 %v178
    %v483 = vunpack.c.l.b16 %v179
    %v484 = vunpack.c.h.b16 %v179
    %v485 = vunpack.c.l.b16 %v180
    %v486 = vunpack.c.h.b16 %v180
    %v487 = vunpack.c.l.b16 %v181
    %v488 = vunpack.c.h.b16 %v181
    %v489 = vunpack.c.l.b16 %v182
    %v490 = vunpack.c.h.b16 %v182
    %v491 = vunpack.c.l.b16 %v183
    %v492 = vunpack.c.h.b16 %v183
    %v493 = vunpack.c.l.b16 %v184
    %v494 = vunpack.c.h.b16 %v184
    %v495 = vunpack.c.l.b16 %v185
    %v496 = vunpack.c.h.b16 %v185
    %v497 = vunpack.c.l.b16 %v186
    %v498 = vunpack.c.h.b16 %v186
    %v499 = vunpack.c.l.b16 %v187
    %v500 = vunpack.c.h.b16 %v187
    %v501 = vunpack.c.l.b16 %v188
    %v502 = vunpack.c.h.b16 %v188
    %v503 = vunpack.c.l.b16 %v189
    %v504 = vunpack.c.h.b16 %v189
    %v505 = vunpack.c.l.b16 %v190
    %v506 = vunpack.c.h.b16 %v190
    %v507 = vunpack.c.l.b16 %v191
    %v508 = vunpack.c.h.b16 %v191
    %v509 = vunpack.c.l.b16 %v192
    %v510 = vunpack.c.h.b16 %v192
    %v511 = vpack.c.b16 %v309, %v307
    %v512 = vpack.c.b16 %v310, %v308
    %v513 = vpack.c.b16 %v313, %v311
    %v514 = vpack.c.b16 %v314, %v312
    %v515 = vpack.c.b16 %v317, %v315
    %v516 = vpack.c.b16 %v318, %v316
    %v517 = vpack.c.b16 %v321, %v319
    %v518 = vpack.c.b16 %v322, %v320
    %v519 = vpack.c.b16 %v325, %v323
    %v520 = vpack.c.b16 %v326, %v324
    %v521 = vpack.c.b16 %v329, %v327
    %v522 = vpack.c.b16 %v330, %v328
    %v523 = vpack.c.b16 %v333, %v331
    %v524 = vpack.c.b16 %v334, %v332
    %v525 = vpack.c.b16 %v337, %v335
    %v526 = vpack.c.b16 %v338, %v336
    %v527 = vpack.c.b16 %v341, %v339
    %v528 = vpack.c.b16 %v342, %v340
    %v529 = vpack.c.b16 %v345, %v343
    %v530 = vpack.c.b16 %v346, %v344
    %v531 = vpack.c.b16 %v349, %v347
    %v532 = vpack.c.b16 %v350, %v348
    %v533 = vpack.c.b16 %v353, %v351
    %v534 = vpack.c.b16 %v354, %v352
    %v535 = vpack.c.b16 %v357, %v355
    %v536 = vpack.c.b16 %v358, %v356
    %v537 = vpack.c.b16 %v361, %v359
    %v538 = vpack.c.b16 %v362, %v360
    %v539 = vpack.c.b16 %v365, %v363
    %v540 = vpack.c.b16 %v366, %v364
    %v541 = vpack.c.b16 %v369, %v367
    %v542 = vpack.c.b16 %v370, %v368
    %v543 = vpack.c.b16 %v373, %v371
    %v544 = vpack.c.b16 %v374, %v372
    %v545 = vpack.c.b16 %v377, %v375
    %v546 = vpack.c.b16 %v378, %v376
    %v547 = vpack.c.b16 %v381, %v379
    %v548 = vpack.c.b16 %v382, %v380
    %v549 = vpack.c.b16 %v385, %v383
    %v550 = vpack.c.b16 %v386, %v384
    %v551 = vpack.c.b16 %v389, %v387
    %v552 = vpack.c.b16 %v390, %v388
    %v553 = vpack.c.b16 %v393, %v391
    %v554 = vpack.c.b16 %v394, %v392
    %v555 = vpack.c.b16 %v397, %v395
    %v556 = vpack.c.b16 %v398, %v396
    %v557 = vpack.c.b16 %v401, %v399
    %v558 = vpack.c.b16 %v402, %v400
    %v559 = vpack.c.b16 %v405, %v403
    %v560 = vpack.c.b16 %v406, %v404
    %v561 = vpack.c.b16 %v409, %v407
    %v562 = vpack.c.b16 %v410, %v408
    %v563 = vpack.c.b16 %v413, %v411
    %v564 = vpack.c.b16 %v414, %v412
    %v565 = vpack.c.b16 %v417, %v415
    %v566 = vpack.c.b16 %v418, %v416
    %v567 = vpack.c.b16 %v421, %v419
    %v568 = vpack.c.b16 %v422, %v420
    %v569 = vpack.c.b16 %v425, %v423
    %v570 = vpack.c.b16 %v426, %v424
    %v571 = vpack.c.b16 %v429, %v427
    %v572 = vpack.c.b16 %v430, %v428
    %v573 = vpack.c.b16 %v433, %v431
    %v574 = vpack.c.b16 %v434, %v432
    %v575 = vpack.c.b16 %v437, %v435
    %v576 = vpack.c.b16 %v438, %v436
    %v577 = vpack.c.b16 %v441, %v439
    %v578 = vpack.c.b16 %v442, %v440
    %v579 = vpack.c.b16 %v445, %v443
    %v580 = vpack.c.b16 %v446, %v444
    %v581 = vpack.c.b16 %v449, %v447
    %v582 = vpack.c.b16 %v450, %v448
    %v583 = vpack.c.b16 %v453, %v451
    %v584 = vpack.c.b16 %v454, %v452
    %v585 = vpack.c.b16 %v457, %v455
    %v586 = vpack.c.b16 %v458, %v456
    %v587 = vpack.c.b16 %v461, %v459
    %v588 = vpack.c.b16 %v462, %v460
    %v589 = vpack.c.b16 %v465, %v463
    %v590 = vpack.c.b16 %v466, %v464
    %v591 = vpack.c.b16 %v469, %v467
    %v592 = vpack.c.b16 %v470, %v468
    %v593 = vpack.c.b16 %v473, %v471
    %v594 = vpack.c.b16 %v474, %v472
    %v595 = vpack.c.b16 %v477, %v475
    %v596 = vpack.c.b16 %v478, %v476
    %v597 = vpack.c.b16 %v481, %v479
    %v598 = vpack.c.b16 %v482, %v480
    %v599 = vpack.c.b16 %v485, %v483
    %v600 = vpack.c.b16 %v486, %v484
    %v601 = vpack.c.b16 %v489, %v487
    %v602 = vpack.c.b16 %v490, %v488
    %v603 = vpack.c.b16 %v493, %v491
    %v604 = vpack.c.b16 %v494, %v492
    %v605 = vpack.c.b16 %v497, %v495
    %v606 = vpack.c.b16 %v498, %v496
    %v607 = vpack.c.b16 %v501, %v499
    %v608 = vpack.c.b16 %v502, %v500
    %v609 = vpack.c.b16 %v505, %v503
    %v610 = vpack.c.b16 %v506, %v504
    %v611 = vpack.c.b16 %v509, %v507
    %v612 = vpack.c.b16 %v510, %v508
    %vm713 = vcmask 351232
    %v715 = vsel %vm713, %v90, 0
    %vm717 = vcmask 1044480
    %vm718 = vcmask 1045504
    %v719 = vsel %vm717, 4294967295, 65535
    %v720 = vsel %vm718, %v719, 0
    %v722 = vand.u32 %v611, %v720
    %v725 = vand.u32 %v612, %v720
    %727 = vmatprep.subr.bf16.mxu0 %v512
    %728 = vmatpush1.bf16.msra.mxu0 %v511
    %729 = vmatprep.subr.bf16.mxu0 %v514
    %730 = vmatpush1.bf16.msra.mxu0 %v513
    %731 = vmatprep.subr.bf16.mxu0 %v516
    %732 = vmatpush1.bf16.msra.mxu0 %v515
    %733 = vmatprep.subr.bf16.mxu0 %v518
    %734 = vmatpush1.bf16.msra.mxu0 %v517
    %735 = vmatprep.subr.bf16.mxu0 %v520
    %736 = vmatpush1.bf16.msra.mxu0 %v519
    %737 = vmatprep.subr.bf16.mxu0 %v522
    %738 = vmatpush1.bf16.msra.mxu0 %v521
    %739 = vmatprep.subr.bf16.mxu0 %v524
    %740 = vmatpush1.bf16.msra.mxu0 %v523
    %741 = vmatprep.subr.bf16.mxu0 %v526
    %742 = vmatpush1.bf16.msra.mxu0 %v525
    %743 = vmatprep.subr.bf16.mxu0 %v528
    %744 = vmatpush1.bf16.msra.mxu0 %v527
    %745 = vmatprep.subr.bf16.mxu0 %v530
    %746 = vmatpush1.bf16.msra.mxu0 %v529
    %747 = vmatprep.subr.bf16.mxu0 %v532
    %748 = vmatpush1.bf16.msra.mxu0 %v531
    %749 = vmatprep.subr.bf16.mxu0 %v534
    %750 = vmatpush1.bf16.msra.mxu0 %v533
    %751 = vmatprep.subr.bf16.mxu0 %v536
    %752 = vmatpush1.bf16.msra.mxu0 %v535
    %753 = vmatprep.subr.bf16.mxu0 %v538
    %754 = vmatpush1.bf16.msra.mxu0 %v537
    %755 = vmatprep.subr.bf16.mxu0 %v540
    %756 = vmatpush1.bf16.msra.mxu0 %v539
    %757 = vmatprep.subr.bf16.mxu0 %v542
    %758 = vmatpush1.bf16.msra.mxu0 %v541
    %759 = vmatprep.mubr.bf16.mxu0 %v85
    %760 = vmatmul.mubr.bf16.gmra.mrb[0].mxu0 %v84
    %v761 = vpop.f32.mrb[0].mxu0
    %v762 = vadd.f32 %v198, %v761
    %v763 = vpop.f32.mrb[0].mxu0
    %v764 = vadd.f32 %v202, %v763
    %v765 = vpop.f32.mrb[0].mxu0
    %v766 = vadd.f32 %v198, %v765
    %v767 = vpop.f32.mrb[0].mxu0
    %v768 = vadd.f32 %v202, %v767
    %769 = vdwg.mxu0
    %770 = vmatprep.subr.bf16.mxu0 %v544
    %771 = vmatpush1.bf16.msra.mxu0 %v543
    %772 = vmatprep.subr.bf16.mxu0 %v546
    %773 = vmatpush1.bf16.msra.mxu0 %v545
    %774 = vmatprep.subr.bf16.mxu0 %v548
    %775 = vmatpush1.bf16.msra.mxu0 %v547
    %776 = vmatprep.subr.bf16.mxu0 %v550
    %777 = vmatpush1.bf16.msra.mxu0 %v549
    %778 = vmatprep.subr.bf16.mxu0 %v552
    %779 = vmatpush1.bf16.msra.mxu0 %v551
    %780 = vmatprep.subr.bf16.mxu0 %v554
    %781 = vmatpush1.bf16.msra.mxu0 %v553
    %782 = vmatprep.subr.bf16.mxu0 %v556
    %783 = vmatpush1.bf16.msra.mxu0 %v555
    %784 = vmatprep.subr.bf16.mxu0 %v558
    %785 = vmatpush1.bf16.msra.mxu0 %v557
    %786 = vmatprep.subr.bf16.mxu0 %v560
    %787 = vmatpush1.bf16.msra.mxu0 %v559
    %788 = vmatprep.subr.bf16.mxu0 %v562
    %789 = vmatpush1.bf16.msra.mxu0 %v561
    %790 = vmatprep.subr.bf16.mxu0 %v564
    %791 = vmatpush1.bf16.msra.mxu0 %v563
    %792 = vmatprep.subr.bf16.mxu0 %v566
    %793 = vmatpush1.bf16.msra.mxu0 %v565
    %794 = vmatprep.subr.bf16.mxu0 %v568
    %795 = vmatpush1.bf16.msra.mxu0 %v567
    %796 = vmatprep.subr.bf16.mxu0 %v570
    %797 = vmatpush1.bf16.msra.mxu0 %v569
    %798 = vmatprep.subr.bf16.mxu0 %v572
    %799 = vmatpush1.bf16.msra.mxu0 %v571
    %800 = vmatprep.subr.bf16.mxu0 %v574
    %801 = vmatpush1.bf16.msra.mxu0 %v573
    %802 = vmatprep.mubr.bf16.mxu0 %v87
    %803 = vmatmul.mubr.bf16.gmra.mrb[0].mxu0 %v86
    %v804 = vpop.f32.mrb[0].mxu0
    %v805 = vadd.f32 %v762, %v804
    %v806 = vpop.f32.mrb[0].mxu0
    %v807 = vadd.f32 %v764, %v806
    %v808 = vpop.f32.mrb[0].mxu0
    %v809 = vadd.f32 %v766, %v808
    %v810 = vpop.f32.mrb[0].mxu0
    %v811 = vadd.f32 %v768, %v810
    %812 = vdwg.mxu0
    %813 = vmatprep.subr.bf16.mxu0 %v576
    %814 = vmatpush1.bf16.msra.mxu0 %v575
    %815 = vmatprep.subr.bf16.mxu0 %v578
    %816 = vmatpush1.bf16.msra.mxu0 %v577
    %817 = vmatprep.subr.bf16.mxu0 %v580
    %818 = vmatpush1.bf16.msra.mxu0 %v579
    %819 = vmatprep.subr.bf16.mxu0 %v582
    %820 = vmatpush1.bf16.msra.mxu0 %v581
    %821 = vmatprep.subr.bf16.mxu0 %v584
    %822 = vmatpush1.bf16.msra.mxu0 %v583
    %823 = vmatprep.subr.bf16.mxu0 %v586
    %824 = vmatpush1.bf16.msra.mxu0 %v585
    %825 = vmatprep.subr.bf16.mxu0 %v588
    %826 = vmatpush1.bf16.msra.mxu0 %v587
    %827 = vmatprep.subr.bf16.mxu0 %v590
    %828 = vmatpush1.bf16.msra.mxu0 %v589
    %829 = vmatprep.subr.bf16.mxu0 %v592
    %830 = vmatpush1.bf16.msra.mxu0 %v591
    %831 = vmatprep.subr.bf16.mxu0 %v594
    %832 = vmatpush1.bf16.msra.mxu0 %v593
    %833 = vmatprep.subr.bf16.mxu0 %v596
    %834 = vmatpush1.bf16.msra.mxu0 %v595
    %835 = vmatprep.subr.bf16.mxu0 %v598
    %836 = vmatpush1.bf16.msra.mxu0 %v597
    %837 = vmatprep.subr.bf16.mxu0 %v600
    %838 = vmatpush1.bf16.msra.mxu0 %v599
    %839 = vmatprep.subr.bf16.mxu0 %v602
    %840 = vmatpush1.bf16.msra.mxu0 %v601
    %841 = vmatprep.subr.bf16.mxu0 %v604
    %842 = vmatpush1.bf16.msra.mxu0 %v603
    %843 = vmatprep.subr.bf16.mxu0 %v606
    %844 = vmatpush1.bf16.msra.mxu0 %v605
    %845 = vmatprep.mubr.bf16.mxu0 %v89
    %846 = vmatmul.mubr.bf16.gmra.mrb[0].mxu0 %v88
    %v847 = vpop.f32.mrb[0].mxu0
    %v848 = vadd.f32 %v805, %v847
    %v849 = vpop.f32.mrb[0].mxu0
    %v850 = vadd.f32 %v807, %v849
    %v851 = vpop.f32.mrb[0].mxu0
    %v852 = vadd.f32 %v809, %v851
    %v853 = vpop.f32.mrb[0].mxu0
    %v854 = vadd.f32 %v811, %v853
    %855 = vdwg.mxu0
    %856 = vmatprep.subr.bf16.mxu0 %v608
    %857 = vmatpush1.bf16.msra.mxu0 %v607
    %858 = vmatprep.subr.bf16.mxu0 %v610
    %859 = vmatpush1.bf16.msra.mxu0 %v609
    %860 = vmatprep.subr.bf16.mxu0 %v725
    %861 = vmatpush1.bf16.msra.mxu0 %v722
    %862 = vmatprep.subr.bf16.mxu0 0
    %863 = vmatpush1.bf16.msra.mxu0 0
    %864 = vmatprep.subr.bf16.mxu0 0
    %865 = vmatpush1.bf16.msra.mxu0 0
    %866 = vmatprep.subr.bf16.mxu0 0
    %867 = vmatpush1.bf16.msra.mxu0 0
    %868 = vmatprep.subr.bf16.mxu0 0
    %869 = vmatpush1.bf16.msra.mxu0 0
    %870 = vmatprep.subr.bf16.mxu0 0
    %871 = vmatpush1.bf16.msra.mxu0 0
    %872 = vmatprep.subr.bf16.mxu0 0
    %873 = vmatpush1.bf16.msra.mxu0 0
    %874 = vmatprep.subr.bf16.mxu0 0
    %875 = vmatpush1.bf16.msra.mxu0 0
    %876 = vmatprep.subr.bf16.mxu0 0
    %877 = vmatpush1.bf16.msra.mxu0 0
    %878 = vmatprep.subr.bf16.mxu0 0
    %879 = vmatpush1.bf16.msra.mxu0 0
    %880 = vmatprep.subr.bf16.mxu0 0
    %881 = vmatpush1.bf16.msra.mxu0 0
    %882 = vmatprep.subr.bf16.mxu0 0
    %883 = vmatpush1.bf16.msra.mxu0 0
    %884 = vmatprep.subr.bf16.mxu0 0
    %885 = vmatpush1.bf16.msra.mxu0 0
    %886 = vmatprep.subr.bf16.mxu0 0
    %887 = vmatpush1.bf16.msra.mxu0 0
    %888 = vmatprep.mubr.bf16.mxu0 0
    %889 = vmatmul.mubr.bf16.gmra.mrb[0].mxu0 %v715
    %v890 = vpop.f32.mrb[0].mxu0
    %v891 = vadd.f32 %v848, %v890
    %v892 = vpop.f32.mrb[0].mxu0
    %v893 = vadd.f32 %v850, %v892
    %v894 = vpop.f32.mrb[0].mxu0
    %v895 = vadd.f32 %v852, %v894
    %v896 = vpop.f32.mrb[0].mxu0
    %v897 = vadd.f32 %v854, %v896
    %898 = vdwg.mxu0
    %v899 = vmax.f32 %v891, 0.0
    %v900 = vmax.f32 %v893, 0.0
    %v901 = vmax.f32 %v895, 0.0
    %v902 = vmax.f32 %v897, 0.0
    %v903 = vpack.c.bf16 %v901, %v899
    %v904 = vpack.c.bf16 %v902, %v900
    %v905 = vld [vmem:[#allocation7] sm:$0xf]
    %v906 = vld [vmem:[#allocation7 + $0x4] sm:$0xf]
    %v907 = vld [vmem:[#allocation7 + $0x8] sm:$0xf]
    %v908 = vld [vmem:[#allocation7 + $0xc] sm:$0xf]
    %v909 = vld [vmem:[#allocation7 + $0x10] sm:$0xf]
    %v910 = vld [vmem:[#allocation7 + $0x14] sm:$0xf]
    %v911 = vld [vmem:[#allocation7 + $0x18] sm:$0xf]
    %v912 = vld [vmem:[#allocation7 + $0x1c] sm:$0xf]
    %v913 = vld [vmem:[#allocation7 + $0x20] sm:$0xf]
    %v914 = vld [vmem:[#allocation7 + $0x24] sm:$0xf]
    %v915 = vld [vmem:[#allocation7 + $0x28] sm:$0xf]
    %v916 = vld [vmem:[#allocation7 + $0x2c] sm:$0xf]
    %v917 = vld [vmem:[#allocation7 + $0x30] sm:$0xf]
    %v918 = vld [vmem:[#allocation7 + $0x34] sm:$0xf]
    %v919 = vld [vmem:[#allocation7 + $0x38] sm:$0xf]
    %v920 = vld [vmem:[#allocation7 + $0x3c] sm:$0xf]
    %v921 = vld [vmem:[#allocation7 + $0x40] sm:$0xf]
    %v922 = vld [vmem:[#allocation7 + $0x44] sm:$0xf]
    %v923 = vld [vmem:[#allocation7 + $0x48] sm:$0xf]
    %v924 = vld [vmem:[#allocation7 + $0x4c] sm:$0xf]
    %v925 = vld [vmem:[#allocation7 + $0x50] sm:$0xf]
    %v926 = vld [vmem:[#allocation7 + $0x54] sm:$0xf]
    %v927 = vld [vmem:[#allocation7 + $0x58] sm:$0xf]
    %v928 = vld [vmem:[#allocation7 + $0x5c] sm:$0xf]
    %v929 = vld [vmem:[#allocation7 + $0x60] sm:$0xf]
    %v930 = vld [vmem:[#allocation7 + $0x64] sm:$0xf]
    %v931 = vld [vmem:[#allocation7 + $0x68] sm:$0xf]
    %v932 = vld [vmem:[#allocation7 + $0x6c] sm:$0xf]
    %v933 = vld [vmem:[#allocation7 + $0x70] sm:$0xf]
    %v934 = vld [vmem:[#allocation7 + $0x74] sm:$0xf]
    %v935 = vld [vmem:[#allocation7 + $0x78] sm:$0xf]
    %v936 = vld [vmem:[#allocation7 + $0x7c] sm:$0xf]
    %v937 = vld [vmem:[%s4] sm:$0x1]
    %v939 = vlaneseq
    %v940 = vshrl.u32 %v939, 7
    %v941 = vsub.s32 0, %v940
    %v942 = vrot.slane %v937, %v941
    %v976 = vunpack.c.l.b16 %v905
    %v977 = vunpack.c.l.b16 %v906
    %v978 = vunpack.c.l.b16 %v907
    %v979 = vunpack.c.l.b16 %v908
    %v980 = vunpack.c.l.b16 %v909
    %v981 = vunpack.c.l.b16 %v910
    %v982 = vunpack.c.l.b16 %v911
    %v983 = vunpack.c.l.b16 %v912
    %v984 = vunpack.c.l.b16 %v913
    %v985 = vunpack.c.l.b16 %v914
    %v986 = vunpack.c.l.b16 %v915
    %v987 = vunpack.c.l.b16 %v916
    %v988 = vunpack.c.l.b16 %v917
    %v989 = vunpack.c.l.b16 %v918
    %v990 = vunpack.c.l.b16 %v919
    %v991 = vunpack.c.l.b16 %v920
    %v992 = vunpack.c.l.b16 %v921
    %v993 = vunpack.c.l.b16 %v922
    %v994 = vunpack.c.l.b16 %v923
    %v995 = vunpack.c.l.b16 %v924
    %v996 = vunpack.c.l.b16 %v925
    %v997 = vunpack.c.l.b16 %v926
    %v998 = vunpack.c.l.b16 %v927
    %v999 = vunpack.c.l.b16 %v928
    %v1000 = vunpack.c.l.b16 %v929
    %v1001 = vunpack.c.l.b16 %v930
    %v1002 = vunpack.c.l.b16 %v931
    %v1003 = vunpack.c.l.b16 %v932
    %v1004 = vunpack.c.l.b16 %v933
    %v1005 = vunpack.c.l.b16 %v934
    %v1006 = vunpack.c.l.b16 %v935
    %v1007 = vunpack.c.l.b16 %v936
    %v1008 = vpack.c.b16 %v977, %v976
    %v1009 = vpack.c.b16 %v979, %v978
    %v1010 = vpack.c.b16 %v981, %v980
    %v1011 = vpack.c.b16 %v983, %v982
    %v1012 = vpack.c.b16 %v985, %v984
    %v1013 = vpack.c.b16 %v987, %v986
    %v1014 = vpack.c.b16 %v989, %v988
    %v1015 = vpack.c.b16 %v991, %v990
    %v1016 = vpack.c.b16 %v993, %v992
    %v1017 = vpack.c.b16 %v995, %v994
    %v1018 = vpack.c.b16 %v997, %v996
    %v1019 = vpack.c.b16 %v999, %v998
    %v1020 = vpack.c.b16 %v1001, %v1000
    %v1021 = vpack.c.b16 %v1003, %v1002
    %v1022 = vpack.c.b16 %v1005, %v1004
    %v1023 = vpack.c.b16 %v1007, %v1006
    %1040 = vmatprep.subr.bf16.mxu0 0
    %1041 = vmatpush1.bf16.msra.mxu0 %v1008
    %1042 = vmatprep.subr.bf16.mxu0 0
    %1043 = vmatpush1.bf16.msra.mxu0 %v1009
    %1044 = vmatprep.subr.bf16.mxu0 0
    %1045 = vmatpush1.bf16.msra.mxu0 %v1010
    %1046 = vmatprep.subr.bf16.mxu0 0
    %1047 = vmatpush1.bf16.msra.mxu0 %v1011
    %1048 = vmatprep.subr.bf16.mxu0 0
    %1049 = vmatpush1.bf16.msra.mxu0 %v1012
    %1050 = vmatprep.subr.bf16.mxu0 0
    %1051 = vmatpush1.bf16.msra.mxu0 %v1013
    %1052 = vmatprep.subr.bf16.mxu0 0
    %1053 = vmatpush1.bf16.msra.mxu0 %v1014
    %1054 = vmatprep.subr.bf16.mxu0 0
    %1055 = vmatpush1.bf16.msra.mxu0 %v1015
    %1056 = vmatprep.subr.bf16.mxu0 0
    %1057 = vmatpush1.bf16.msra.mxu0 %v1016
    %1058 = vmatprep.subr.bf16.mxu0 0
    %1059 = vmatpush1.bf16.msra.mxu0 %v1017
    %1060 = vmatprep.subr.bf16.mxu0 0
    %1061 = vmatpush1.bf16.msra.mxu0 %v1018
    %1062 = vmatprep.subr.bf16.mxu0 0
    %1063 = vmatpush1.bf16.msra.mxu0 %v1019
    %1064 = vmatprep.subr.bf16.mxu0 0
    %1065 = vmatpush1.bf16.msra.mxu0 %v1020
    %1066 = vmatprep.subr.bf16.mxu0 0
    %1067 = vmatpush1.bf16.msra.mxu0 %v1021
    %1068 = vmatprep.subr.bf16.mxu0 0
    %1069 = vmatpush1.bf16.msra.mxu0 %v1022
    %1070 = vmatprep.subr.bf16.mxu0 0
    %1071 = vmatpush1.bf16.msra.mxu0 %v1023
    %1072 = vmatprep.mubr.bf16.mxu0 %v904
    %1073 = vmatmul.mubr.bf16.gmra.mrb[0].mxu0 %v903
    %v1074 = vpop.f32.mrb[0].mxu0
    %v1075 = vadd.f32 %v942, %v1074
    %v1076 = vpop.f32.mrb[0].mxu0
    %v1077 = vpop.f32.mrb[0].mxu0
    %v1078 = vadd.f32 %v942, %v1077
    %v1079 = vpop.f32.mrb[0].mxu0
    %1080 = vdwg.mxu0
    %v1081 = vmax.f32 %v1075, 0.0
    %v1082 = vmax.f32 %v1078, 0.0
    %v1083 = vld [vmem:[%s5] sm:$0x1]
    %v1085 = vlaneseq
    %v1086 = vshrl.u32 %v1085, 7
    %v1087 = vsub.s32 0, %v1086
    %v1088 = vrot.slane %v1083, %v1087
    %v1090 = vmul.f32 %v1081, %v1088
    %v1091 = vmul.f32 %v1082, %v1088
    %1092 = vadd.xlane.f32.xlu0 %v1090
    %v1093 = vpop.xlane.xlu0 %1092
    %1094 = vadd.xlane.f32.xlu0 %v1091
    %v1095 = vpop.xlane.xlu0 %1094
    %v1096 = vld [vmem:[#allocation2] sm:$0x1]
    %v1098 = vlaneseq
    %v1099 = vshrl.u32 %v1098, 7
    %v1100 = vsub.s32 0, %v1099
    %v1101 = vrot.slane %v1096, %v1100
    %v1103 = vadd.f32 %v1093, %v1101
    %v1104 = vadd.f32 %v1095, %v1101
    %vm1105 = vcmask 7168
    %1106 = vst.msk [vmem:[%s7] sm:$0xff] %vm1105, %v1103
    %1107 = vst.msk [vmem:[%s7 + $0x8] sm:$0xff] %vm1105, %v1104
    // Predicated region
    $region42: #{tpu_custom_call.1} parent=1 // pred_check
      _
    $region43: #{tpu_custom_call.1} parent=1 // pred_check_branch
      %1109 = sbr.rel (0) target = $region45
    $region44: #{tpu_custom_call.1} parent=1 // pred_region
      _
    $region45: #{tpu_custom_call.1} parent=1 // pred_fallthru
      _
    // Predicated region
    $region46: #{tpu_custom_call.1} parent=1 // pred_check
      _
    $region47: #{tpu_custom_call.1} parent=1 // pred_check_branch
      %1111 = sbr.rel (0) target = $region49
    $region48: #{tpu_custom_call.1} parent=1 // pred_region
      _
    $region49: #{tpu_custom_call.1} parent=1 // pred_fallthru
      _
    %1112 = vsyncpa [#allocation4], 1
    %1113 = vsyncpa [#allocation6], 1

</llo_original>
